<compile_context>
chip_gen: v5e
topology: v5e:2x2
jax: 0.10.0
libtpu: 0.0.40
codegen_flags: <defaults>
</compile_context>

<pallas_src>
import math
from functools import partial

import jax
import jax.numpy as jnp
from jax.experimental import pallas as pl
from jax.experimental.pallas import tpu as pltpu


# ----------------------------------------------------------------------------
# Fused DAB kernel: one grid step == one batch element.
# ----------------------------------------------------------------------------
def _dab_kernel(low_ref, high_ref, w1h_ref, w1l_ref, b1_ref, w2_ref, b2_ref,
                out_ref, *, C, inv_hw):
    low = low_ref[0]        # (C, HWp)  f32
    high = high_ref[0]      # (C, HWp)  f32

    # Global average pool over the spatial (lane) axis. Spatial zero-padding
    # does not perturb the sums; we divide by the true H*W.
    mean_high = jnp.sum(high, axis=-1, keepdims=True) * inv_hw   # (C, 1)
    mean_low = jnp.sum(low, axis=-1, keepdims=True) * inv_hw     # (C, 1)

    # Squeeze linear + ReLU:  h1 = relu(W_sq @ [mean_high; mean_low] + b_sq)
    # W_sq is pre-split into its "high" and "low" column blocks so no in-kernel
    # concatenation is needed.
    h1 = (jnp.dot(w1h_ref[...], mean_high, preferred_element_type=jnp.float32)
          + jnp.dot(w1l_ref[...], mean_low, preferred_element_type=jnp.float32)
          + b1_ref[...])                                          # (Hid, 1)
    h1 = jnp.maximum(h1, 0.0)

    # Excite linear + sigmoid -> per-channel gate for the "diff" branch.
    logits = (jnp.dot(w2_ref[...], h1, preferred_element_type=jnp.float32)
              + b2_ref[...])                                      # (C, 1)
    w_diff = 1.0 / (1.0 + jnp.exp(-logits))
    w_com = 1.0 - w_diff

    # Fused add/sub, gating and channel-concat (written straight into the
    # final (2C, HWp) output block -> no separate concat pass in HBM).
    out_ref[0, :C, :] = (high + low) * w_com      # final_com
    out_ref[0, C:, :] = (high - low) * w_diff     # final_diff


def dab_forward(fea_low, fea_high, params):
    """fea_low/fea_high: (B, C, H, W) f32 NCHW.  Returns (B, 2C, H, W)."""
    assert fea_high.shape == fea_low.shape
    b, c, h, w = fea_low.shape
    # TODO(synk): add channel padding for C not a multiple of 8 (sublane tile).
    assert c % 8 == 0, "C must be a multiple of 8"

    hw = h * w
    hwp = pl.cdiv(hw, 128) * 128                  # lane-align the spatial axis

    low = fea_low.reshape(b, c, hw).astype(jnp.float32)
    high = fea_high.reshape(b, c, hw).astype(jnp.float32)
    if hwp != hw:
        pad = ((0, 0), (0, 0), (0, hwp - hw))
        low = jnp.pad(low, pad)
        high = jnp.pad(high, pad)

    # PyTorch Linear layouts: sq_w (Hid, 2C), ex_w (C, Hid). Pre-split sq_w into
    # its high/low column halves and pad Hid up to a sublane multiple with zeros
    # (exact: padded rows give relu(0)=0 and their ex_w columns are zero).
    w1 = params['sq_w'].astype(jnp.float32)       # (Hid, 2C)
    hidden = w1.shape[0]
    hid_p = max(8, pl.cdiv(hidden, 8) * 8)
    w1h = w1[:, :c]
    w1l = w1[:, c:]
    b1 = params['sq_b'].astype(jnp.float32).reshape(hidden, 1)
    w2 = params['ex_w'].astype(jnp.float32)       # (C, Hid)
    b2 = params['ex_b'].astype(jnp.float32).reshape(c, 1)
    if hid_p != hidden:
        w1h = jnp.pad(w1h, ((0, hid_p - hidden), (0, 0)))
        w1l = jnp.pad(w1l, ((0, hid_p - hidden), (0, 0)))
        b1 = jnp.pad(b1, ((0, hid_p - hidden), (0, 0)))
        w2 = jnp.pad(w2, ((0, 0), (0, hid_p - hidden)))

    kernel = partial(_dab_kernel, C=c, inv_hw=1.0 / float(hw))

    out = pl.pallas_call(
        kernel,
        out_shape=jax.ShapeDtypeStruct((b, 2 * c, hwp), jnp.float32),
        grid_spec=pltpu.PrefetchScalarGridSpec(
            num_scalar_prefetch=0,
            grid=(b,),
            in_specs=[
                pl.BlockSpec((1, c, hwp), lambda i: (i, 0, 0)),   # fea_low
                pl.BlockSpec((1, c, hwp), lambda i: (i, 0, 0)),   # fea_high
                pl.BlockSpec((hid_p, c), lambda i: (0, 0)),       # sq_w (high cols)
                pl.BlockSpec((hid_p, c), lambda i: (0, 0)),       # sq_w (low cols)
                pl.BlockSpec((hid_p, 1), lambda i: (0, 0)),       # sq_b
                pl.BlockSpec((c, hid_p), lambda i: (0, 0)),       # ex_w
                pl.BlockSpec((c, 1), lambda i: (0, 0)),           # ex_b
            ],
            out_specs=pl.BlockSpec((1, 2 * c, hwp), lambda i: (i, 0, 0)),
        ),
        compiler_params=pltpu.CompilerParams(
            dimension_semantics=("parallel",)),                   # megacore-able
    )(low, high, w1h, w1l, b1, w2, b2)

    return out[:, :, :hw].reshape(b, 2 * c, h, w)


# ----------------------------------------------------------------------------
# Pure-JAX reference (mirrors the PyTorch forward exactly).
# ----------------------------------------------------------------------------
def dab_reference(fea_low, fea_high, params):
    fea_com = fea_high + fea_low
    fea_diff = fea_high - fea_low
    feas = jnp.concatenate([fea_high, fea_low], axis=1)
    pooled = feas.mean(axis=-1).mean(axis=-1)                     # (B, 2C)
    hi = jax.lax.Precision.HIGHEST
    fea_sq = jax.nn.relu(
        jnp.dot(pooled, params['sq_w'].T, precision=hi) + params['sq_b'])
    w_diff = jax.nn.sigmoid(
        jnp.dot(fea_sq, params['ex_w'].T, precision=hi) + params['ex_b'])
    w_com = 1.0 - w_diff
    final_com = fea_com * w_com[:, :, None, None]
    final_diff = fea_diff * w_diff[:, :, None, None]
    return jnp.concatenate([final_com, final_diff], axis=1)


# ----------------------------------------------------------------------------
if __name__ == "__main__":
    # Small shapes consistent with the module. reduction=16 requires
    # 2*C // 16 >= 1, so use C=32 (hidden = 4).
    B, C, H, W = 2, 32, 16, 16
    reduction = 16
    hidden = 2 * C // reduction

    key = jax.random.PRNGKey(0)
    kx, ky, k1, k2, k3, k4 = jax.random.split(key, 6)
    fea_low = jax.random.normal(kx, (B, C, H, W), dtype=jnp.float32)
    fea_high = jax.random.normal(ky, (B, C, H, W), dtype=jnp.float32)

    # The PyTorch module builds the Linear layers (fresh random weights) inside
    # forward(); here deterministic weights with the same shapes / init scale
    # are generated once and passed in.
    bound1 = 1.0 / math.sqrt(2 * C)
    bound2 = 1.0 / math.sqrt(hidden)
    params = {
        'sq_w': jax.random.uniform(k1, (hidden, 2 * C), jnp.float32, -bound1, bound1),
        'sq_b': jax.random.uniform(k2, (hidden,), jnp.float32, -bound1, bound1),
        'ex_w': jax.random.uniform(k3, (C, hidden), jnp.float32, -bound2, bound2),
        'ex_b': jax.random.uniform(k4, (C,), jnp.float32, -bound2, bound2),
    }

    fwd = jax.jit(lambda lo, hi: dab_forward(lo, hi, params))
    out = jax.block_until_ready(fwd(fea_low, fea_high))

    assert out.shape == (B, 2 * C, H, W), out.shape
    assert bool(jnp.all(jnp.isfinite(out)))

    ref = dab_reference(fea_low, fea_high, params)
    max_err = float(jnp.max(jnp.abs(out - ref)))
    assert max_err < 2e-3, f"max abs error vs reference: {max_err}"

    print("KERNEL_OK")
</pallas_src>

<mosaic_0001>
module attributes {stable_mosaic.version = 11 : i64} {
  func.func @_dab_kernel(%arg0: i32, %arg1: memref<1x32x256xf32, #tpu.memory_space<vmem>>, %arg2: memref<1x32x256xf32, #tpu.memory_space<vmem>>, %arg3: memref<8x32xf32, #tpu.memory_space<vmem>>, %arg4: memref<8x32xf32, #tpu.memory_space<vmem>>, %arg5: memref<8x1xf32, #tpu.memory_space<vmem>>, %arg6: memref<32x8xf32, #tpu.memory_space<vmem>>, %arg7: memref<32x1xf32, #tpu.memory_space<vmem>>, %arg8: memref<1x64x256xf32, #tpu.memory_space<vmem>>) attributes {dimension_semantics = [#tpu.dimension_semantics<parallel>], iteration_bounds = array<i64: 2>, scalar_prefetch = 0 : i64, scratch_operands = 0 : i64, tpu.core_type = #tpu.core_type<tc>, window_params = [{transform_indices = @transform_0, window_bounds = array<i64: 1, 32, 256>}, {transform_indices = @transform_1, window_bounds = array<i64: 1, 32, 256>}, {pipeline_mode = #tpu.pipeline_mode<synchronous>, transform_indices = @transform_2, window_bounds = array<i64: 8, 32>}, {pipeline_mode = #tpu.pipeline_mode<synchronous>, transform_indices = @transform_3, window_bounds = array<i64: 8, 32>}, {pipeline_mode = #tpu.pipeline_mode<synchronous>, transform_indices = @transform_4, window_bounds = array<i64: 8, 1>}, {pipeline_mode = #tpu.pipeline_mode<synchronous>, transform_indices = @transform_5, window_bounds = array<i64: 32, 8>}, {pipeline_mode = #tpu.pipeline_mode<synchronous>, transform_indices = @transform_6, window_bounds = array<i64: 32, 1>}, {transform_indices = @transform_7, window_bounds = array<i64: 1, 64, 256>}]} {
    %c0 = arith.constant 0 : index
    %c0_0 = arith.constant 0 : index
    %c0_1 = arith.constant 0 : index
    %0 = vector.load %arg1[%c0, %c0_0, %c0_1] : memref<1x32x256xf32, #tpu.memory_space<vmem>>, vector<1x32x256xf32>
    %1 = vector.shape_cast %0 : vector<1x32x256xf32> to vector<32x256xf32>
    %c0_2 = arith.constant 0 : index
    %c0_3 = arith.constant 0 : index
    %c0_4 = arith.constant 0 : index
    %2 = vector.load %arg2[%c0_2, %c0_3, %c0_4] : memref<1x32x256xf32, #tpu.memory_space<vmem>>, vector<1x32x256xf32>
    %3 = vector.shape_cast %2 : vector<1x32x256xf32> to vector<32x256xf32>
    %cst = arith.constant dense<0.000000e+00> : vector<32xf32>
    %4 = vector.multi_reduction <add>, %3, %cst [1] : vector<32x256xf32> to vector<32xf32>
    %5 = vector.shape_cast %4 : vector<32xf32> to vector<32x1xf32>
    %cst_5 = arith.constant 3.906250e-03 : f32
    %6 = vector.broadcast %cst_5 : f32 to vector<32x1xf32>
    %7 = arith.mulf %5, %6 : vector<32x1xf32>
    %cst_6 = arith.constant dense<0.000000e+00> : vector<32xf32>
    %8 = vector.multi_reduction <add>, %1, %cst_6 [1] : vector<32x256xf32> to vector<32xf32>
    %9 = vector.shape_cast %8 : vector<32xf32> to vector<32x1xf32>
    %cst_7 = arith.constant 3.906250e-03 : f32
    %10 = vector.broadcast %cst_7 : f32 to vector<32x1xf32>
    %11 = arith.mulf %9, %10 : vector<32x1xf32>
    %c0_8 = arith.constant 0 : index
    %c0_9 = arith.constant 0 : index
    %12 = vector.load %arg3[%c0_8, %c0_9] : memref<8x32xf32, #tpu.memory_space<vmem>>, vector<8x32xf32>
    %cst_10 = arith.constant dense<0.000000e+00> : vector<8x1xf32>
    %13 = tpu.matmul %12, %7, %cst_10 {dimension_numbers = #tpu.dot_dimension_numbers<[1], [0], [0], [1], [0, 0, 1, 1], [], []>} : vector<8x32xf32>, vector<32x1xf32>, vector<8x1xf32> -> vector<8x1xf32>
    %c0_11 = arith.constant 0 : index
    %c0_12 = arith.constant 0 : index
    %14 = vector.load %arg4[%c0_11, %c0_12] : memref<8x32xf32, #tpu.memory_space<vmem>>, vector<8x32xf32>
    %cst_13 = arith.constant dense<0.000000e+00> : vector<8x1xf32>
    %15 = tpu.matmul %14, %11, %cst_13 {dimension_numbers = #tpu.dot_dimension_numbers<[1], [0], [0], [1], [0, 0, 1, 1], [], []>} : vector<8x32xf32>, vector<32x1xf32>, vector<8x1xf32> -> vector<8x1xf32>
    %16 = arith.addf %13, %15 : vector<8x1xf32>
    %c0_14 = arith.constant 0 : index
    %c0_15 = arith.constant 0 : index
    %17 = vector.load %arg5[%c0_14, %c0_15] : memref<8x1xf32, #tpu.memory_space<vmem>>, vector<8x1xf32>
    %18 = arith.addf %16, %17 : vector<8x1xf32>
    %cst_16 = arith.constant 0.000000e+00 : f32
    %19 = vector.broadcast %cst_16 : f32 to vector<8x1xf32>
    %20 = arith.maximumf %18, %19 : vector<8x1xf32>
    %c0_17 = arith.constant 0 : index
    %c0_18 = arith.constant 0 : index
    %21 = vector.load %arg6[%c0_17, %c0_18] : memref<32x8xf32, #tpu.memory_space<vmem>>, vector<32x8xf32>
    %cst_19 = arith.constant dense<0.000000e+00> : vector<32x1xf32>
    %22 = tpu.matmul %21, %20, %cst_19 {dimension_numbers = #tpu.dot_dimension_numbers<[1], [0], [0], [1], [0, 0, 1, 1], [], []>} : vector<32x8xf32>, vector<8x1xf32>, vector<32x1xf32> -> vector<32x1xf32>
    %c0_20 = arith.constant 0 : index
    %c0_21 = arith.constant 0 : index
    %23 = vector.load %arg7[%c0_20, %c0_21] : memref<32x1xf32, #tpu.memory_space<vmem>>, vector<32x1xf32>
    %24 = arith.addf %22, %23 : vector<32x1xf32>
    %cst_22 = arith.constant 0.000000e+00 : f32
    %25 = vector.broadcast %cst_22 : f32 to vector<32x1xf32>
    %26 = arith.subf %25, %24 : vector<32x1xf32>
    %27 = math.exp %26 : vector<32x1xf32>
    %cst_23 = arith.constant 1.000000e+00 : f32
    %28 = vector.broadcast %cst_23 : f32 to vector<32x1xf32>
    %29 = arith.addf %28, %27 : vector<32x1xf32>
    %cst_24 = arith.constant 1.000000e+00 : f32
    %30 = vector.broadcast %cst_24 : f32 to vector<32x1xf32>
    %31 = arith.divf %30, %29 : vector<32x1xf32>
    %cst_25 = arith.constant 1.000000e+00 : f32
    %32 = vector.broadcast %cst_25 : f32 to vector<32x1xf32>
    %33 = arith.subf %32, %31 : vector<32x1xf32>
    %34 = arith.addf %3, %1 : vector<32x256xf32>
    %35 = vector.broadcast %33 : vector<32x1xf32> to vector<32x256xf32>
    %36 = arith.mulf %34, %35 : vector<32x256xf32>
    %c0_26 = arith.constant 0 : index
    %c0_27 = arith.constant 0 : index
    %c0_28 = arith.constant 0 : index
    %37 = vector.load %arg8[%c0_26, %c0_27, %c0_28] : memref<1x64x256xf32, #tpu.memory_space<vmem>>, vector<1x32x256xf32>
    %38 = vector.shape_cast %37 : vector<1x32x256xf32> to vector<32x256xf32>
    %39 = vector.shape_cast %36 : vector<32x256xf32> to vector<1x32x256xf32>
    tpu.vector_store %arg8[%c0_26, %c0_27, %c0_28], %39 {strides = array<i32>} : memref<1x64x256xf32, #tpu.memory_space<vmem>>, vector<1x32x256xf32>,
    %40 = arith.subf %3, %1 : vector<32x256xf32>
    %41 = vector.broadcast %31 : vector<32x1xf32> to vector<32x256xf32>
    %42 = arith.mulf %40, %41 : vector<32x256xf32>
    %c0_29 = arith.constant 0 : index
    %c32 = arith.constant 32 : index
    %c0_30 = arith.constant 0 : index
    %43 = vector.load %arg8[%c0_29, %c32, %c0_30] : memref<1x64x256xf32, #tpu.memory_space<vmem>>, vector<1x32x256xf32>
    %44 = vector.shape_cast %43 : vector<1x32x256xf32> to vector<32x256xf32>
    %45 = vector.shape_cast %42 : vector<32x256xf32> to vector<1x32x256xf32>
    tpu.vector_store %arg8[%c0_29, %c32, %c0_30], %45 {strides = array<i32>} : memref<1x64x256xf32, #tpu.memory_space<vmem>>, vector<1x32x256xf32>,
    return
  }
  func.func @transform_0(%arg0: i32) -> (i32, i32, i32) {
    %c0_i32 = arith.constant 0 : i32
    %c0_i32_0 = arith.constant 0 : i32
    %c0_i32_1 = arith.constant 0 : i32
    return %arg0, %c0_i32, %c0_i32_0 : i32, i32, i32
  }
  func.func @transform_1(%arg0: i32) -> (i32, i32, i32) {
    %c0_i32 = arith.constant 0 : i32
    %c0_i32_0 = arith.constant 0 : i32
    %c0_i32_1 = arith.constant 0 : i32
    return %arg0, %c0_i32, %c0_i32_0 : i32, i32, i32
  }
  func.func @transform_2(%arg0: i32) -> (i32, i32) {
    %c0_i32 = arith.constant 0 : i32
    %c0_i32_0 = arith.constant 0 : i32
    %c0_i32_1 = arith.constant 0 : i32
    return %c0_i32, %c0_i32_0 : i32, i32
  }
  func.func @transform_3(%arg0: i32) -> (i32, i32) {
    %c0_i32 = arith.constant 0 : i32
    %c0_i32_0 = arith.constant 0 : i32
    %c0_i32_1 = arith.constant 0 : i32
    return %c0_i32, %c0_i32_0 : i32, i32
  }
  func.func @transform_4(%arg0: i32) -> (i32, i32) {
    %c0_i32 = arith.constant 0 : i32
    %c0_i32_0 = arith.constant 0 : i32
    %c0_i32_1 = arith.constant 0 : i32
    return %c0_i32, %c0_i32_0 : i32, i32
  }
  func.func @transform_5(%arg0: i32) -> (i32, i32) {
    %c0_i32 = arith.constant 0 : i32
    %c0_i32_0 = arith.constant 0 : i32
    %c0_i32_1 = arith.constant 0 : i32
    return %c0_i32, %c0_i32_0 : i32, i32
  }
  func.func @transform_6(%arg0: i32) -> (i32, i32) {
    %c0_i32 = arith.constant 0 : i32
    %c0_i32_0 = arith.constant 0 : i32
    %c0_i32_1 = arith.constant 0 : i32
    return %c0_i32, %c0_i32_0 : i32, i32
  }
  func.func @transform_7(%arg0: i32) -> (i32, i32, i32) {
    %c0_i32 = arith.constant 0 : i32
    %c0_i32_0 = arith.constant 0 : i32
    %c0_i32_1 = arith.constant 0 : i32
    return %arg0, %c0_i32, %c0_i32_0 : i32, i32, i32
  }
}

</mosaic_0001>

<llo_original>
// kernel: _lambda_.1
$region0: #{_lambda_.1}
  #allocation0 [shape = 'u32[]', space=smem, size = 0x4, offset = 0x4, fixed_abs, tag = 'smem constant byte address 0x4 - core index']
  #allocation1 [shape = 'u32[72,128]{1,0:T(1,128)}', space=vmem, size = 0x9000, scoped, tag = 'internal scratch']
  %s0 = inlined_call_operand.vmem [shape: f32[2,32,256], index: 0, kind: input, shape index: {}]
  %s1 = inlined_call_operand.vmem [shape: f32[2,32,256], index: 1, kind: input, shape index: {}]
  %s2 = inlined_call_operand.vmem [shape: f32[8,32], index: 2, kind: input, shape index: {}]
  %s3 = inlined_call_operand.vmem [shape: f32[8,32], index: 3, kind: input, shape index: {}]
  %s4 = inlined_call_operand.vmem [shape: f32[8,1], index: 4, kind: input, shape index: {}]
  %s5 = inlined_call_operand.vmem [shape: f32[32,8], index: 5, kind: input, shape index: {}]
  %s6 = inlined_call_operand.vmem [shape: f32[32,1], index: 6, kind: input, shape index: {}]
  %s7 = inlined_call_operand.vmem [shape: f32[2,64,256], index: 7, kind: output, shape index: {}]
  %s8 = sld [smem:[#allocation0]]
  $region61: #{_lambda_.1} parent=0
    _
  %s10 = ssub.s32 1, %s8
  %s11 = scalar_select 0, %s10, %s8
  loop: start=0, step=1, limit=4
  $region2: #{_lambda_.1} parent=0 // loop_pre_header
    _
  $region3: #{_lambda_.1} parent=0 // loop_header
    %s13 = sphi 0, %s17
    %p14 = scmp.ge.s32.totalorder %s13, 4
    %s23 = sphi 0, %s25
    %s26 = sphi 0, %s23
    %s27 = sphi 0, %s26
    %s43 = sphi 0, %s27
    %s49 = sphi 0, %s51
    %s52 = sphi 0, %s49
    %s53 = sphi 0, %s52
    %s69 = sphi 0, %s53
    %s73 = sphi 0, %s73
    %s75 = sphi 0, %s73
    %s76 = sphi 0, %s75
    %s90 = sphi 0, %s76
    %s94 = sphi 0, %s94
    %s96 = sphi 0, %s94
    %s97 = sphi 0, %s96
    %s111 = sphi 0, %s97
    %s115 = sphi 0, %s115
    %s117 = sphi 0, %s115
    %s118 = sphi 0, %s117
    %s132 = sphi 0, %s118
    %s136 = sphi 0, %s136
    %s138 = sphi 0, %s136
    %s139 = sphi 0, %s138
    %s153 = sphi 0, %s139
    %s157 = sphi 0, %s157
    %s159 = sphi 0, %s157
    %s160 = sphi 0, %s159
    %s174 = sphi 0, %s160
    %s180 = sphi 0, %s182
    %s183 = sphi 0, %s180
    %s184 = sphi 0, %s183
    %s200 = sphi 0, %s184
  $region4: #{_lambda_.1} parent=0 // loop_header_branch
    %16 = sbr.rel (%p14) target = $region8
  $region5: #{_lambda_.1} parent=0 // loop_body
    %s18 = ssub.s32 %s13, 1
    %s19 = ssub.s32 %s13, 2
    %s20 = sadd.s32 %s13, 1
    %s21 = ssub.s32 %s13, %s20
    %p22 = scmp.eq.s32.totalorder %s21, 0
    %s24 = sadd.s32 %s23, 1
    %s25 = scalar_select %p22, %s23, %s24
    %p28 = pneg %p22
    %p29 = scmp.eq.s32.totalorder %s13, 1
    %p30 = por %p28, %p29
    %p31 = scmp.ne.s32.totalorder %s23, %s26
    %p32 = scmp.eq.s32.totalorder %s13, 0
    %p33 = por %p31, %p32
    %p34 = scmp.ne.s32.totalorder %s23, %s26
    %p35 = scmp.eq.s32.totalorder %s18, 1
    %p36 = por %p34, %p35
    %p37 = scmp.ne.s32.totalorder %s26, %s27
    %p38 = scmp.eq.s32.totalorder %s18, 0
    %p39 = por %p37, %p38
    %p40 = scmp.ne.s32.totalorder %s26, %s27
    %p41 = scmp.eq.s32.totalorder %s19, 1
    %p42 = por %p40, %p41
    %p44 = scmp.ne.s32.totalorder %s27, %s43
    %p45 = scmp.eq.s32.totalorder %s19, 0
    %p46 = por %p44, %p45
    %s47 = ssub.s32 %s13, %s20
    %p48 = scmp.eq.s32.totalorder %s47, 0
    %s50 = sadd.s32 %s49, 1
    %s51 = scalar_select %p48, %s49, %s50
    %p54 = pneg %p48
    %p55 = scmp.eq.s32.totalorder %s13, 1
    %p56 = por %p54, %p55
    %p57 = scmp.ne.s32.totalorder %s49, %s52
    %p58 = scmp.eq.s32.totalorder %s13, 0
    %p59 = por %p57, %p58
    %p60 = scmp.ne.s32.totalorder %s49, %s52
    %p61 = scmp.eq.s32.totalorder %s18, 1
    %p62 = por %p60, %p61
    %p63 = scmp.ne.s32.totalorder %s52, %s53
    %p64 = scmp.eq.s32.totalorder %s18, 0
    %p65 = por %p63, %p64
    %p66 = scmp.ne.s32.totalorder %s52, %s53
    %p67 = scmp.eq.s32.totalorder %s19, 1
    %p68 = por %p66, %p67
    %p70 = scmp.ne.s32.totalorder %s53, %s69
    %p71 = scmp.eq.s32.totalorder %s19, 0
    %p72 = por %p70, %p71
    %s74 = sadd.s32 %s73, 1
    %p77 = scmp.eq.s32.totalorder %s13, 1
    %p78 = scmp.ne.s32.totalorder %s73, %s75
    %p79 = scmp.eq.s32.totalorder %s13, 0
    %p80 = por %p78, %p79
    %p81 = scmp.ne.s32.totalorder %s73, %s75
    %p82 = scmp.eq.s32.totalorder %s18, 1
    %p83 = por %p81, %p82
    %p84 = scmp.ne.s32.totalorder %s75, %s76
    %p85 = scmp.eq.s32.totalorder %s18, 0
    %p86 = por %p84, %p85
    %p87 = scmp.ne.s32.totalorder %s75, %s76
    %p88 = scmp.eq.s32.totalorder %s19, 1
    %p89 = por %p87, %p88
    %p91 = scmp.ne.s32.totalorder %s76, %s90
    %p92 = scmp.eq.s32.totalorder %s19, 0
    %p93 = por %p91, %p92
    %s95 = sadd.s32 %s94, 1
    %p98 = scmp.eq.s32.totalorder %s13, 1
    %p99 = scmp.ne.s32.totalorder %s94, %s96
    %p100 = scmp.eq.s32.totalorder %s13, 0
    %p101 = por %p99, %p100
    %p102 = scmp.ne.s32.totalorder %s94, %s96
    %p103 = scmp.eq.s32.totalorder %s18, 1
    %p104 = por %p102, %p103
    %p105 = scmp.ne.s32.totalorder %s96, %s97
    %p106 = scmp.eq.s32.totalorder %s18, 0
    %p107 = por %p105, %p106
    %p108 = scmp.ne.s32.totalorder %s96, %s97
    %p109 = scmp.eq.s32.totalorder %s19, 1
    %p110 = por %p108, %p109
    %p112 = scmp.ne.s32.totalorder %s97, %s111
    %p113 = scmp.eq.s32.totalorder %s19, 0
    %p114 = por %p112, %p113
    %s116 = sadd.s32 %s115, 1
    %p119 = scmp.eq.s32.totalorder %s13, 1
    %p120 = scmp.ne.s32.totalorder %s115, %s117
    %p121 = scmp.eq.s32.totalorder %s13, 0
    %p122 = por %p120, %p121
    %p123 = scmp.ne.s32.totalorder %s115, %s117
    %p124 = scmp.eq.s32.totalorder %s18, 1
    %p125 = por %p123, %p124
    %p126 = scmp.ne.s32.totalorder %s117, %s118
    %p127 = scmp.eq.s32.totalorder %s18, 0
    %p128 = por %p126, %p127
    %p129 = scmp.ne.s32.totalorder %s117, %s118
    %p130 = scmp.eq.s32.totalorder %s19, 1
    %p131 = por %p129, %p130
    %p133 = scmp.ne.s32.totalorder %s118, %s132
    %p134 = scmp.eq.s32.totalorder %s19, 0
    %p135 = por %p133, %p134
    %s137 = sadd.s32 %s136, 1
    %p140 = scmp.eq.s32.totalorder %s13, 1
    %p141 = scmp.ne.s32.totalorder %s136, %s138
    %p142 = scmp.eq.s32.totalorder %s13, 0
    %p143 = por %p141, %p142
    %p144 = scmp.ne.s32.totalorder %s136, %s138
    %p145 = scmp.eq.s32.totalorder %s18, 1
    %p146 = por %p144, %p145
    %p147 = scmp.ne.s32.totalorder %s138, %s139
    %p148 = scmp.eq.s32.totalorder %s18, 0
    %p149 = por %p147, %p148
    %p150 = scmp.ne.s32.totalorder %s138, %s139
    %p151 = scmp.eq.s32.totalorder %s19, 1
    %p152 = por %p150, %p151
    %p154 = scmp.ne.s32.totalorder %s139, %s153
    %p155 = scmp.eq.s32.totalorder %s19, 0
    %p156 = por %p154, %p155
    %s158 = sadd.s32 %s157, 1
    %p161 = scmp.eq.s32.totalorder %s13, 1
    %p162 = scmp.ne.s32.totalorder %s157, %s159
    %p163 = scmp.eq.s32.totalorder %s13, 0
    %p164 = por %p162, %p163
    %p165 = scmp.ne.s32.totalorder %s157, %s159
    %p166 = scmp.eq.s32.totalorder %s18, 1
    %p167 = por %p165, %p166
    %p168 = scmp.ne.s32.totalorder %s159, %s160
    %p169 = scmp.eq.s32.totalorder %s18, 0
    %p170 = por %p168, %p169
    %p171 = scmp.ne.s32.totalorder %s159, %s160
    %p172 = scmp.eq.s32.totalorder %s19, 1
    %p173 = por %p171, %p172
    %p175 = scmp.ne.s32.totalorder %s160, %s174
    %p176 = scmp.eq.s32.totalorder %s19, 0
    %p177 = por %p175, %p176
    %s178 = ssub.s32 %s13, %s20
    %p179 = scmp.eq.s32.totalorder %s178, 0
    %s181 = sadd.s32 %s180, 1
    %s182 = scalar_select %p179, %s180, %s181
    %p185 = pneg %p179
    %p186 = scmp.eq.s32.totalorder %s13, 1
    %p187 = por %p185, %p186
    %p188 = scmp.ne.s32.totalorder %s180, %s183
    %p189 = scmp.eq.s32.totalorder %s13, 0
    %p190 = por %p188, %p189
    %p191 = scmp.ne.s32.totalorder %s180, %s183
    %p192 = scmp.eq.s32.totalorder %s18, 1
    %p193 = por %p191, %p192
    %p194 = scmp.ne.s32.totalorder %s183, %s184
    %p195 = scmp.eq.s32.totalorder %s18, 0
    %p196 = por %p194, %p195
    %p197 = scmp.ne.s32.totalorder %s183, %s184
    %p198 = scmp.eq.s32.totalorder %s19, 1
    %p199 = por %p197, %p198
    %p201 = scmp.ne.s32.totalorder %s184, %s200
    %p202 = scmp.eq.s32.totalorder %s19, 0
    %p203 = por %p201, %p202
    %p204 = scmp.le.s32.totalorder 1, %s13
    %p205 = scmp.lt.s32.totalorder %s13, 3
    %p206 = pnand %p204, %p205
    %p207 = pneg %p206
    // Predicated region
    $region9: #{_lambda_.1} parent=5 // pred_check
      _
    $region10: #{_lambda_.1} parent=5 // pred_check_branch
      %209 = sbr.rel (%p206) target = $region12
    $region11: #{_lambda_.1} parent=5 // pred_region
      %s210 = ssub.s32 %s13, 1
      // Predicated region
      $region13: #{_lambda_.1} parent=11 // pred_check
        %p211 = pneg %p86
      $region14: #{_lambda_.1} parent=11 // pred_check_branch
        %213 = sbr.rel (%p211) target = $region16
      $region15: #{_lambda_.1} parent=11 // pred_region
        _
      $region16: #{_lambda_.1} parent=11 // pred_fallthru
        _
      // Predicated region
      $region17: #{_lambda_.1} parent=11 // pred_check
        %p214 = pneg %p107
      $region18: #{_lambda_.1} parent=11 // pred_check_branch
        %216 = sbr.rel (%p214) target = $region20
      $region19: #{_lambda_.1} parent=11 // pred_region
        _
      $region20: #{_lambda_.1} parent=11 // pred_fallthru
        _
      // Predicated region
      $region21: #{_lambda_.1} parent=11 // pred_check
        %p217 = pneg %p128
      $region22: #{_lambda_.1} parent=11 // pred_check_branch
        %219 = sbr.rel (%p217) target = $region24
      $region23: #{_lambda_.1} parent=11 // pred_region
        _
      $region24: #{_lambda_.1} parent=11 // pred_fallthru
        _
      // Predicated region
      $region25: #{_lambda_.1} parent=11 // pred_check
        %p220 = pneg %p149
      $region26: #{_lambda_.1} parent=11 // pred_check_branch
        %222 = sbr.rel (%p220) target = $region28
      $region27: #{_lambda_.1} parent=11 // pred_region
        _
      $region28: #{_lambda_.1} parent=11 // pred_fallthru
        _
      // Predicated region
      $region29: #{_lambda_.1} parent=11 // pred_check
        %p223 = pneg %p170
      $region30: #{_lambda_.1} parent=11 // pred_check_branch
        %225 = sbr.rel (%p223) target = $region32
      $region31: #{_lambda_.1} parent=11 // pred_region
        _
      $region32: #{_lambda_.1} parent=11 // pred_fallthru
        _
    $region12: #{_lambda_.1} parent=5 // pred_fallthru
      _
    %p226 = scmp.lt.s32.totalorder %s13, 2
    // Predicated region
    $region33: #{_lambda_.1} parent=5 // pred_check
      %p227 = pneg %p226
    $region34: #{_lambda_.1} parent=5 // pred_check_branch
      %229 = sbr.rel (%p227) target = $region36
    $region35: #{_lambda_.1} parent=5 // pred_region
      // Predicated region
      $region37: #{_lambda_.1} parent=35 // pred_check
        %p230 = pneg %p33
      $region38: #{_lambda_.1} parent=35 // pred_check_branch
        %232 = sbr.rel (%p230) target = $region40
      $region39: #{_lambda_.1} parent=35 // pred_region
        %p233 = scmp.lt.s32.totalorder %s13, 1
        %s234 = scalar_select %p233, %s13, 1
        %s235 = smul.addr %s234, 8
        %s236 = smul.addr %s235, 8
        %s237 = scalar_lea.vmem %s0, %s236
      $region40: #{_lambda_.1} parent=35 // pred_fallthru
        _
      // Predicated region
      $region41: #{_lambda_.1} parent=35 // pred_check
        %p238 = pneg %p59
      $region42: #{_lambda_.1} parent=35 // pred_check_branch
        %240 = sbr.rel (%p238) target = $region44
      $region43: #{_lambda_.1} parent=35 // pred_region
        %p241 = scmp.lt.s32.totalorder %s13, 1
        %s242 = scalar_select %p241, %s13, 1
        %s243 = smul.addr %s242, 8
        %s244 = smul.addr %s243, 8
        %s245 = scalar_lea.vmem %s1, %s244
      $region44: #{_lambda_.1} parent=35 // pred_fallthru
        _
    $region36: #{_lambda_.1} parent=5 // pred_fallthru
      _
    %p246 = scmp.le.s32.totalorder 1, %s13
    %p247 = scmp.lt.s32.totalorder %s13, 3
    %p248 = pnand %p246, %p247
    %p249 = pneg %p248
    // Predicated region
    $region45: #{_lambda_.1} parent=5 // pred_check
      _
    $region46: #{_lambda_.1} parent=5 // pred_check_branch
      %251 = sbr.rel (%p248) target = $region48
    $region47: #{_lambda_.1} parent=5 // pred_region
      %s252 = ssub.s32 %s13, 1
      %p253 = scmp.lt.s32.totalorder %s18, 1
      %s254 = scalar_select %p253, %s18, 1
      %s255 = smul.addr %s254, 8
      %s256 = smul.addr %s255, 8
      %s257 = scalar_lea.vmem %s0, %s256
      %p258 = pneg %p39
      %p259 = pneg %p36
      %p260 = scmp.lt.s32.totalorder %s18, 1
      %s261 = scalar_select %p260, %s18, 1
      %s262 = smul.addr %s261, 8
      %s263 = smul.addr %s262, 8
      %s264 = scalar_lea.vmem %s1, %s263
      %p265 = pneg %p65
      %p266 = pneg %p62
      %p267 = pneg %p86
      %p268 = pneg %p83
      %p269 = pneg %p107
      %p270 = pneg %p104
      %p271 = pneg %p128
      %p272 = pneg %p125
      %p273 = pneg %p149
      %p274 = pneg %p146
      %p275 = pneg %p170
      %p276 = pneg %p167
      %p277 = pneg %p196
      %p278 = pneg %p193
      %p279 = scmp.lt.s32.totalorder %s18, 1
      %s280 = scalar_select %p279, %s18, 1
      %s281 = smul.addr %s280, 16
      %s282 = smul.addr %s281, 8
      %s283 = scalar_lea.vmem %s7, %s282
      %p284 = scmp.lt.s32.totalorder %s18, 1
      %s285 = scalar_select %p284, %s18, 1
      %s286 = smul.addr %s285, 8
      %s287 = smul.addr %s286, 8
      %s288 = scalar_lea.vmem %s0, %s287
      %p289 = scmp.lt.s32.totalorder %s18, 1
      %s290 = scalar_select %p289, %s18, 1
      %s291 = smul.addr %s290, 8
      %s292 = smul.addr %s291, 8
      %s293 = scalar_lea.vmem %s1, %s292
      %p294 = scmp.lt.s32.totalorder %s18, 1
      %s295 = scalar_select %p294, %s18, 1
      %s296 = smul.addr %s295, 16
      %s297 = smul.addr %s296, 8
      %s298 = scalar_lea.vmem %s7, %s297
      %v299 = vld [vmem:[%s288] sm:$0xff]
      %v300 = vld [vmem:[%s288 + $0x8] sm:$0xff]
      %v301 = vld [vmem:[%s288 + $0x10] sm:$0xff]
      %v302 = vld [vmem:[%s288 + $0x18] sm:$0xff]
      %v303 = vld [vmem:[%s288 + $0x20] sm:$0xff]
      %v304 = vld [vmem:[%s288 + $0x28] sm:$0xff]
      %v305 = vld [vmem:[%s288 + $0x30] sm:$0xff]
      %v306 = vld [vmem:[%s288 + $0x38] sm:$0xff]
      %v307 = vld [vmem:[%s293] sm:$0xff]
      %v308 = vld [vmem:[%s293 + $0x8] sm:$0xff]
      %v309 = vld [vmem:[%s293 + $0x10] sm:$0xff]
      %v310 = vld [vmem:[%s293 + $0x18] sm:$0xff]
      %v311 = vld [vmem:[%s293 + $0x20] sm:$0xff]
      %v312 = vld [vmem:[%s293 + $0x28] sm:$0xff]
      %v313 = vld [vmem:[%s293 + $0x30] sm:$0xff]
      %v314 = vld [vmem:[%s293 + $0x38] sm:$0xff]
      %v315 = vadd.f32 %v307, %v308
      %316 = vadd.xlane.f32.xlu0 %v315
      %v317 = vpop.xlane.xlu0 %316
      %v318 = vadd.f32 %v309, %v310
      %319 = vadd.xlane.f32.xlu0 %v318
      %v320 = vpop.xlane.xlu0 %319
      %v321 = vadd.f32 %v311, %v312
      %322 = vadd.xlane.f32.xlu0 %v321
      %v323 = vpop.xlane.xlu0 %322
      %v324 = vadd.f32 %v313, %v314
      %325 = vadd.xlane.f32.xlu0 %v324
      %v326 = vpop.xlane.xlu0 %325
      %v327 = vmul.f32 %v317, 0.00390625
      %v328 = vmul.f32 %v320, 0.00390625
      %v329 = vmul.f32 %v323, 0.00390625
      %v330 = vmul.f32 %v326, 0.00390625
      %v331 = vadd.f32 %v299, %v300
      %332 = vadd.xlane.f32.xlu0 %v331
      %v333 = vpop.xlane.xlu0 %332
      %v334 = vadd.f32 %v301, %v302
      %335 = vadd.xlane.f32.xlu0 %v334
      %v336 = vpop.xlane.xlu0 %335
      %v337 = vadd.f32 %v303, %v304
      %338 = vadd.xlane.f32.xlu0 %v337
      %v339 = vpop.xlane.xlu0 %338
      %v340 = vadd.f32 %v305, %v306
      %341 = vadd.xlane.f32.xlu0 %v340
      %v342 = vpop.xlane.xlu0 %341
      %v343 = vmul.f32 %v333, 0.00390625
      %v344 = vmul.f32 %v336, 0.00390625
      %v345 = vmul.f32 %v339, 0.00390625
      %v346 = vmul.f32 %v342, 0.00390625
      %v347 = vld [vmem:[%s2] sm:$0xff]
      %v348 = vld [vmem:[%s3] sm:$0xff]
      %vm349 = vcmask 261120
      %v351 = vsel %vm349, %v348, 0
      %353 = vmatpush.msra.mxu0 0.0
      %354 = vmatpush.msra.mxu0 0.0
      %355 = vmatpush.msra.mxu0 0.0
      %356 = vmatpush.msra.mxu0 0.0
      %357 = vmatpush.msra.mxu0 0.0
      %358 = vmatpush.msra.mxu0 0.0
      %359 = vmatpush.msra.mxu0 0.0
      %360 = vmatpush.msra.mxu0 0.0
      %361 = vmatpush.msra.mxu0 0.0
      %362 = vmatpush.msra.mxu0 0.0
      %363 = vmatpush.msra.mxu0 0.0
      %364 = vmatpush.msra.mxu0 0.0
      %365 = vmatpush.msra.mxu0 %v346
      %366 = vmatpush.msra.mxu0 %v345
      %367 = vmatpush.msra.mxu0 %v344
      %368 = vmatpush.msra.mxu0 %v343
      %369 = vmatmul.f32.gmra.mxu0 %v351
      %v370 = vpop.f32.mrf.mxu0
      %v371 = vadd.f32 0.0, %v370
      %372 = vdwg.mxu0
      %v374 = vsel %vm349, %v347, 0
      %376 = vmatpush.msra.mxu0 0.0
      %377 = vmatpush.msra.mxu0 0.0
      %378 = vmatpush.msra.mxu0 0.0
      %379 = vmatpush.msra.mxu0 0.0
      %380 = vmatpush.msra.mxu0 0.0
      %381 = vmatpush.msra.mxu0 0.0
      %382 = vmatpush.msra.mxu0 0.0
      %383 = vmatpush.msra.mxu0 0.0
      %384 = vmatpush.msra.mxu0 0.0
      %385 = vmatpush.msra.mxu0 0.0
      %386 = vmatpush.msra.mxu0 0.0
      %387 = vmatpush.msra.mxu0 0.0
      %388 = vmatpush.msra.mxu0 %v330
      %389 = vmatpush.msra.mxu0 %v329
      %390 = vmatpush.msra.mxu0 %v328
      %391 = vmatpush.msra.mxu0 %v327
      %392 = vmatmul.f32.gmra.mxu0 %v374
      %v393 = vpop.f32.mrf.mxu0
      %v394 = vadd.f32 %v371, %v393
      %395 = vdwg.mxu0
      %v396 = vld [vmem:[%s4] sm:$0xff]
      %v397 = vadd.f32 %v394, %v396
      %v398 = vmax.f32 %v397, 0.0
      %v399 = vld [vmem:[%s5] sm:$0xff]
      %v400 = vld [vmem:[%s5 + $0x8] sm:$0xff]
      %v401 = vld [vmem:[%s5 + $0x10] sm:$0xff]
      %v402 = vld [vmem:[%s5 + $0x18] sm:$0xff]
      %v403 = vld [vmem:[%s6] sm:$0xff]
      %v404 = vld [vmem:[%s6 + $0x8] sm:$0xff]
      %v405 = vld [vmem:[%s6 + $0x10] sm:$0xff]
      %v406 = vld [vmem:[%s6 + $0x18] sm:$0xff]
      %vm407 = vcmask 64512
      %v409 = vsel %vm407, %v399, 0
      %v412 = vsel %vm407, %v400, 0
      %v415 = vsel %vm407, %v401, 0
      %v418 = vsel %vm407, %v402, 0
      %420 = vmatpush.msra.mxu0 0.0
      %421 = vmatpush.msra.mxu0 0.0
      %422 = vmatpush.msra.mxu0 0.0
      %423 = vmatpush.msra.mxu0 0.0
      %424 = vmatpush.msra.mxu0 0.0
      %425 = vmatpush.msra.mxu0 0.0
      %426 = vmatpush.msra.mxu0 0.0
      %427 = vmatpush.msra.mxu0 0.0
      %428 = vmatpush.msra.mxu0 0.0
      %429 = vmatpush.msra.mxu0 0.0
      %430 = vmatpush.msra.mxu0 0.0
      %431 = vmatpush.msra.mxu0 0.0
      %432 = vmatpush.msra.mxu0 0.0
      %433 = vmatpush.msra.mxu0 0.0
      %434 = vmatpush.msra.mxu0 0.0
      %435 = vmatpush.msra.mxu0 %v398
      %436 = vmatmul.f32.gmra.mxu0 %v409
      %v437 = vpop.f32.mrf.mxu0
      %v438 = vadd.f32 %v403, %v437
      %439 = vmatmul.f32.gmra.mxu0 %v412
      %v440 = vpop.f32.mrf.mxu0
      %v441 = vadd.f32 %v404, %v440
      %442 = vmatmul.f32.gmra.mxu0 %v415
      %v443 = vpop.f32.mrf.mxu0
      %v444 = vadd.f32 %v405, %v443
      %445 = vmatmul.f32.gmra.mxu0 %v418
      %v446 = vpop.f32.mrf.mxu0
      %v447 = vadd.f32 %v406, %v446
      %448 = vdwg.mxu0
      %v449 = vsub.f32 0.0, %v438
      %v450 = vsub.f32 0.0, %v441
      %v451 = vsub.f32 0.0, %v444
      %v452 = vsub.f32 0.0, %v447
      %v453 = vmul.f32 %v449, 1.442695
      %v454 = vpow.pop %v453
      %v455 = vmul.f32 %v450, 1.442695
      %v456 = vpow.pop %v455
      %v457 = vmul.f32 %v451, 1.442695
      %v458 = vpow.pop %v457
      %v459 = vmul.f32 %v452, 1.442695
      %v460 = vpow.pop %v459
      %v461 = vadd.f32 %v454, 1.0
      %v462 = vadd.f32 %v456, 1.0
      %v463 = vadd.f32 %v458, 1.0
      %v464 = vadd.f32 %v460, 1.0
      %v465 = vrcp.pop %v461
      %v466 = vmul.f32 %v461, %v465
      %v467 = vsub.f32 1.0, %v466
      %v468 = vmul.f32 %v465, %v467
      %v469 = vadd.f32 %v465, %v468
      %vm470 = vweird.f32 %v461
      %vm471 = vweird.f32 %v465
      %vm472 = vmor %vm470, %vm471
      %v473 = vsel %vm472, %v465, %v469
      %v474 = vand.u32 2147483647, %v461
      %vm475 = vcmp.eq.f32.partialorder %v474, 8.507059e+37
      %v476 = vand.u32 %v461, 2147483648
      %v477 = vor.u32 1.1754944e-38, %v476
      %v478 = vsel %vm475, %v477, %v473
      %v479 = vmul.f32 1.0, %v478
      %v480 = vrcp.pop %v462
      %v481 = vmul.f32 %v462, %v480
      %v482 = vsub.f32 1.0, %v481
      %v483 = vmul.f32 %v480, %v482
      %v484 = vadd.f32 %v480, %v483
      %vm485 = vweird.f32 %v462
      %vm486 = vweird.f32 %v480
      %vm487 = vmor %vm485, %vm486
      %v488 = vsel %vm487, %v480, %v484
      %v489 = vand.u32 2147483647, %v462
      %vm490 = vcmp.eq.f32.partialorder %v489, 8.507059e+37
      %v491 = vand.u32 %v462, 2147483648
      %v492 = vor.u32 1.1754944e-38, %v491
      %v493 = vsel %vm490, %v492, %v488
      %v494 = vmul.f32 1.0, %v493
      %v495 = vrcp.pop %v463
      %v496 = vmul.f32 %v463, %v495
      %v497 = vsub.f32 1.0, %v496
      %v498 = vmul.f32 %v495, %v497
      %v499 = vadd.f32 %v495, %v498
      %vm500 = vweird.f32 %v463
      %vm501 = vweird.f32 %v495
      %vm502 = vmor %vm500, %vm501
      %v503 = vsel %vm502, %v495, %v499
      %v504 = vand.u32 2147483647, %v463
      %vm505 = vcmp.eq.f32.partialorder %v504, 8.507059e+37
      %v506 = vand.u32 %v463, 2147483648
      %v507 = vor.u32 1.1754944e-38, %v506
      %v508 = vsel %vm505, %v507, %v503
      %v509 = vmul.f32 1.0, %v508
      %v510 = vrcp.pop %v464
      %v511 = vmul.f32 %v464, %v510
      %v512 = vsub.f32 1.0, %v511
      %v513 = vmul.f32 %v510, %v512
      %v514 = vadd.f32 %v510, %v513
      %vm515 = vweird.f32 %v464
      %vm516 = vweird.f32 %v510
      %vm517 = vmor %vm515, %vm516
      %v518 = vsel %vm517, %v510, %v514
      %v519 = vand.u32 2147483647, %v464
      %vm520 = vcmp.eq.f32.partialorder %v519, 8.507059e+37
      %v521 = vand.u32 %v464, 2147483648
      %v522 = vor.u32 1.1754944e-38, %v521
      %v523 = vsel %vm520, %v522, %v518
      %v524 = vmul.f32 1.0, %v523
      %v525 = vsub.f32 1.0, %v479
      %v526 = vsub.f32 1.0, %v494
      %v527 = vsub.f32 1.0, %v509
      %v528 = vsub.f32 1.0, %v524
      %v529 = vadd.f32 %v307, %v299
      %v530 = vadd.f32 %v308, %v300
      %v531 = vadd.f32 %v309, %v301
      %v532 = vadd.f32 %v310, %v302
      %v533 = vadd.f32 %v311, %v303
      %v534 = vadd.f32 %v312, %v304
      %v535 = vadd.f32 %v313, %v305
      %v536 = vadd.f32 %v314, %v306
      %538 = vset.pattern.permute.xlu0 0
      %539 = vperm.xlu0 %538, %v525
      %v540 = vpop.permute.xlu0 %539
      %543 = vset.pattern.permute.xlu0 0
      %544 = vperm.xlu0 %543, %v526
      %v545 = vpop.permute.xlu0 %544
      %548 = vset.pattern.permute.xlu0 0
      %549 = vperm.xlu0 %548, %v527
      %v550 = vpop.permute.xlu0 %549
      %553 = vset.pattern.permute.xlu0 0
      %554 = vperm.xlu0 %553, %v528
      %v555 = vpop.permute.xlu0 %554
      %v557 = vmul.f32 %v529, %v540
      %v558 = vmul.f32 %v530, %v540
      %v559 = vmul.f32 %v531, %v545
      %v560 = vmul.f32 %v532, %v545
      %v561 = vmul.f32 %v533, %v550
      %v562 = vmul.f32 %v534, %v550
      %v563 = vmul.f32 %v535, %v555
      %v564 = vmul.f32 %v536, %v555
      %565 = vst [vmem:[%s298] sm:$0xff] %v557
      %566 = vst [vmem:[%s298 + $0x8] sm:$0xff] %v558
      %567 = vst [vmem:[%s298 + $0x10] sm:$0xff] %v559
      %568 = vst [vmem:[%s298 + $0x18] sm:$0xff] %v560
      %569 = vst [vmem:[%s298 + $0x20] sm:$0xff] %v561
      %570 = vst [vmem:[%s298 + $0x28] sm:$0xff] %v562
      %571 = vst [vmem:[%s298 + $0x30] sm:$0xff] %v563
      %572 = vst [vmem:[%s298 + $0x38] sm:$0xff] %v564
      %v573 = vsub.f32 %v307, %v299
      %v574 = vsub.f32 %v308, %v300
      %v575 = vsub.f32 %v309, %v301
      %v576 = vsub.f32 %v310, %v302
      %v577 = vsub.f32 %v311, %v303
      %v578 = vsub.f32 %v312, %v304
      %v579 = vsub.f32 %v313, %v305
      %v580 = vsub.f32 %v314, %v306
      %582 = vset.pattern.permute.xlu0 0
      %583 = vperm.xlu0 %582, %v479
      %v584 = vpop.permute.xlu0 %583
      %587 = vset.pattern.permute.xlu0 0
      %588 = vperm.xlu0 %587, %v494
      %v589 = vpop.permute.xlu0 %588
      %592 = vset.pattern.permute.xlu0 0
      %593 = vperm.xlu0 %592, %v509
      %v594 = vpop.permute.xlu0 %593
      %597 = vset.pattern.permute.xlu0 0
      %598 = vperm.xlu0 %597, %v524
      %v599 = vpop.permute.xlu0 %598
      %v601 = vmul.f32 %v573, %v584
      %v602 = vmul.f32 %v574, %v584
      %v603 = vmul.f32 %v575, %v589
      %v604 = vmul.f32 %v576, %v589
      %v605 = vmul.f32 %v577, %v594
      %v606 = vmul.f32 %v578, %v594
      %v607 = vmul.f32 %v579, %v599
      %v608 = vmul.f32 %v580, %v599
      %609 = vst [vmem:[%s298 + $0x40] sm:$0xff] %v601
      %610 = vst [vmem:[%s298 + $0x48] sm:$0xff] %v602
      %611 = vst [vmem:[%s298 + $0x50] sm:$0xff] %v603
      %612 = vst [vmem:[%s298 + $0x58] sm:$0xff] %v604
      %613 = vst [vmem:[%s298 + $0x60] sm:$0xff] %v605
      %614 = vst [vmem:[%s298 + $0x68] sm:$0xff] %v606
      %615 = vst [vmem:[%s298 + $0x70] sm:$0xff] %v607
      %616 = vst [vmem:[%s298 + $0x78] sm:$0xff] %v608
      %p617 = scmp.lt.s32.totalorder %s18, 1
      %s618 = scalar_select %p617, %s18, 1
      %s619 = smul.addr %s618, 16
      %s620 = smul.addr %s619, 8
      %s621 = scalar_lea.vmem %s7, %s620
      // Predicated region
      $region49: #{_lambda_.1} parent=47 // pred_check
        %p622 = pneg %p193
      $region50: #{_lambda_.1} parent=47 // pred_check_branch
        %624 = sbr.rel (%p622) target = $region52
      $region51: #{_lambda_.1} parent=47 // pred_region
        _
      $region52: #{_lambda_.1} parent=47 // pred_fallthru
        _
    $region48: #{_lambda_.1} parent=5 // pred_fallthru
      _
    %p625 = scmp.le.s32.totalorder 2, %s13
    // Predicated region
    $region53: #{_lambda_.1} parent=5 // pred_check
      %p626 = pneg %p625
    $region54: #{_lambda_.1} parent=5 // pred_check_branch
      %628 = sbr.rel (%p626) target = $region56
    $region55: #{_lambda_.1} parent=5 // pred_region
      %s629 = ssub.s32 %s13, 2
      // Predicated region
      $region57: #{_lambda_.1} parent=55 // pred_check
        %p630 = pneg %p199
      $region58: #{_lambda_.1} parent=55 // pred_check_branch
        %632 = sbr.rel (%p630) target = $region60
      $region59: #{_lambda_.1} parent=55 // pred_region
        %p633 = scmp.lt.s32.totalorder %s19, 1
        %s634 = scalar_select %p633, %s19, 1
        %s635 = smul.addr %s634, 16
        %s636 = smul.addr %s635, 8
        %s637 = scalar_lea.vmem %s7, %s636
      $region60: #{_lambda_.1} parent=55 // pred_fallthru
        _
    $region56: #{_lambda_.1} parent=5 // pred_fallthru
      _
  $region6: #{_lambda_.1} parent=0 // loop_footer
    %s17 = sadd.s32 1, %s13
  $region7: #{_lambda_.1} parent=0 // loop_footer_branch
    %12 = sbr.rel target = $region3
  $region8: #{_lambda_.1} parent=0 // loop_exit
    _

</llo_original>
